<compile_context>
chip_gen: v6e
topology: v6e:2x2x1
jax: 0.10.0
libtpu: 0.0.40
codegen_flags: <defaults>
</compile_context>

<pallas_src>
import jax
import jax.numpy as jnp
from jax.experimental import pallas as pl
from jax.experimental.pallas import tpu as pltpu

SCALES = 3
ALPHA = 0.5


def _avg_pool2d(x, k):
    """Exact f32 equivalent of F.avg_pool2d(x, kernel_size=k) for H,W % k == 0."""
    if k == 1:
        return x
    B, C, H, W = x.shape
    return x.reshape(B, C, H // k, k, W // k, k).mean(axis=(3, 5))


def _make_kernel(B, C, dims, scales, alpha):
    """Build the per-(b, c)-channel kernel with all normalizers folded in."""
    coeffs = []
    for s, (h, w) in enumerate(dims):
        # alpha^s * (1/scales) * (1/count) for the x- and y-gradient L1 means.
        cx = (alpha ** s) / (scales * B * C * h * (w - 1))
        cy = (alpha ** s) / (scales * B * C * (h - 1) * w)
        coeffs.append((h, w, cx, cy))

    def kernel(*refs):
        # refs = (p0, t0, p1, t1, ..., out); p_s/t_s have shape (H_s, W_s).
        o_ref = refs[-1]
        total = jnp.float32(0.0)
        for s, (h, w, cx, cy) in enumerate(coeffs):
            p_ref = refs[2 * s]
            t_ref = refs[2 * s + 1]
            # Forward differences via overlapping VMEM windows
            # (mirrors pred[..., 1:] - pred[..., :-1] in the PyTorch module).
            pgx = p_ref[:, pl.ds(1, w - 1)] - p_ref[:, pl.ds(0, w - 1)]
            tgx = t_ref[:, pl.ds(1, w - 1)] - t_ref[:, pl.ds(0, w - 1)]
            pgy = p_ref[pl.ds(1, h - 1), :] - p_ref[pl.ds(0, h - 1), :]
            tgy = t_ref[pl.ds(1, h - 1), :] - t_ref[pl.ds(0, h - 1), :]
            total = total + cx * jnp.sum(jnp.abs(pgx - tgx)) \
                          + cy * jnp.sum(jnp.abs(pgy - tgy))
        o_ref[...] = jnp.reshape(total, (1, 1))

    return kernel


def gradient_loss(pred, target, scales=SCALES, alpha=ALPHA):
    """pred, target: [B, C, H, W]. Returns the scalar GradientLoss."""
    assert pred.shape == target.shape and pred.ndim == 4
    B, C, H, W = pred.shape
    div = 2 ** (scales - 1)
    # TODO(synk): non-divisible H/W (avg_pool2d floor semantics) would need
    #             ragged pooling; not needed for the divisible test shapes.
    assert H % div == 0 and W % div == 0, "H, W must be divisible by 2**(scales-1)"

    pred = pred.astype(jnp.float32)
    target = target.astype(jnp.float32)

    # TODO(synk): the avg_pool2d pyramid stays in XLA (exact f32). Fusing it
    #             into the kernel needs either MXU averaging matrices (reduced
    #             f32 matmul precision) or strided sublane/lane loads.
    levels = []
    dims = []
    for s in range(scales):
        k = 2 ** s
        levels.append(_avg_pool2d(pred, k))
        levels.append(_avg_pool2d(target, k))
        dims.append((H // k, W // k))

    kernel = _make_kernel(B, C, dims, scales, alpha)

    in_specs = []
    for (h, w) in dims:
        spec = pl.BlockSpec((None, None, h, w), lambda b, c: (b, c, 0, 0))
        in_specs += [spec, spec]

    per_channel = pl.pallas_call(
        kernel,
        out_shape=jax.ShapeDtypeStruct((B, C, 1, 1), jnp.float32),
        grid=(B, C),
        in_specs=in_specs,
        out_specs=pl.BlockSpec((None, None, 1, 1), lambda b, c: (b, c, 0, 0)),
        compiler_params=pltpu.CompilerParams(
            # Channels are independent -> both axes parallel (v7x megacore).
            dimension_semantics=("parallel", "parallel")),
    )(*levels)

    # Per-channel partials already carry 1/scales, alpha^s and the mean
    # denominators, so the final loss is just their sum.
    return jnp.sum(per_channel)


def _reference_loss(pred, target, scales=SCALES, alpha=ALPHA):
    """Pure-JAX port of the PyTorch GradientLoss for verification."""
    B, C, H, W = pred.shape
    loss = jnp.float32(0.0)
    for s in range(scales):
        k = 2 ** s
        if s > 0:
            pd = pred.reshape(B, C, H // k, k, W // k, k).mean(axis=(3, 5))
            td = target.reshape(B, C, H // k, k, W // k, k).mean(axis=(3, 5))
        else:
            pd, td = pred, target
        pgx = pd[:, :, :, 1:] - pd[:, :, :, :-1]
        pgy = pd[:, :, 1:, :] - pd[:, :, :-1, :]
        tgx = td[:, :, :, 1:] - td[:, :, :, :-1]
        tgy = td[:, :, 1:, :] - td[:, :, :-1, :]
        loss = loss + (alpha ** s) * (jnp.mean(jnp.abs(pgx - tgx))
                                      + jnp.mean(jnp.abs(pgy - tgy)))
    return loss / scales


if __name__ == "__main__":
    key = jax.random.PRNGKey(0)
    k1, k2 = jax.random.split(key)
    shape = (2, 4, 16, 16)   # [B, C, H, W]
    pred = jax.random.normal(k1, shape, jnp.float32)
    target = jax.random.normal(k2, shape, jnp.float32)

    loss = gradient_loss(pred, target)
    loss = jax.block_until_ready(loss)

    ref = _reference_loss(pred, target)
    assert jnp.allclose(loss, ref, rtol=1e-4, atol=1e-6), (loss, ref)
    print("KERNEL_OK")
</pallas_src>

<mosaic_0001>
module attributes {stable_mosaic.version = 11 : i64} {
  func.func @kernel(%arg0: i32, %arg1: i32, %arg2: memref<1x1x16x16xf32, #tpu.memory_space<vmem>>, %arg3: memref<1x1x16x16xf32, #tpu.memory_space<vmem>>, %arg4: memref<1x1x8x8xf32, #tpu.memory_space<vmem>>, %arg5: memref<1x1x8x8xf32, #tpu.memory_space<vmem>>, %arg6: memref<1x1x4x4xf32, #tpu.memory_space<vmem>>, %arg7: memref<1x1x4x4xf32, #tpu.memory_space<vmem>>, %arg8: memref<1x1x1x1xf32, #tpu.memory_space<vmem>>) attributes {dimension_semantics = [#tpu.dimension_semantics<parallel>, #tpu.dimension_semantics<parallel>], iteration_bounds = array<i64: 2, 4>, scalar_prefetch = 0 : i64, scratch_operands = 0 : i64, tpu.core_type = #tpu.core_type<tc>, window_params = [{transform_indices = @transform_0, window_bounds = array<i64: 1, 1, 16, 16>}, {transform_indices = @transform_1, window_bounds = array<i64: 1, 1, 16, 16>}, {transform_indices = @transform_2, window_bounds = array<i64: 1, 1, 8, 8>}, {transform_indices = @transform_3, window_bounds = array<i64: 1, 1, 8, 8>}, {transform_indices = @transform_4, window_bounds = array<i64: 1, 1, 4, 4>}, {transform_indices = @transform_5, window_bounds = array<i64: 1, 1, 4, 4>}, {transform_indices = @transform_6, window_bounds = array<i64: 1, 1, 1, 1>}]} {
    %c0 = arith.constant 0 : index
    %c0_0 = arith.constant 0 : index
    %c0_1 = arith.constant 0 : index
    %c1 = arith.constant 1 : index
    %0 = vector.load %arg2[%c0, %c0_0, %c0_1, %c1] : memref<1x1x16x16xf32, #tpu.memory_space<vmem>>, vector<1x1x16x15xf32>
    %1 = vector.shape_cast %0 : vector<1x1x16x15xf32> to vector<16x15xf32>
    %c0_2 = arith.constant 0 : index
    %c0_3 = arith.constant 0 : index
    %c0_4 = arith.constant 0 : index
    %c0_5 = arith.constant 0 : index
    %2 = vector.load %arg2[%c0_2, %c0_3, %c0_4, %c0_5] : memref<1x1x16x16xf32, #tpu.memory_space<vmem>>, vector<1x1x16x15xf32>
    %3 = vector.shape_cast %2 : vector<1x1x16x15xf32> to vector<16x15xf32>
    %4 = arith.subf %1, %3 : vector<16x15xf32>
    %c0_6 = arith.constant 0 : index
    %c0_7 = arith.constant 0 : index
    %c0_8 = arith.constant 0 : index
    %c1_9 = arith.constant 1 : index
    %5 = vector.load %arg3[%c0_6, %c0_7, %c0_8, %c1_9] : memref<1x1x16x16xf32, #tpu.memory_space<vmem>>, vector<1x1x16x15xf32>
    %6 = vector.shape_cast %5 : vector<1x1x16x15xf32> to vector<16x15xf32>
    %c0_10 = arith.constant 0 : index
    %c0_11 = arith.constant 0 : index
    %c0_12 = arith.constant 0 : index
    %c0_13 = arith.constant 0 : index
    %7 = vector.load %arg3[%c0_10, %c0_11, %c0_12, %c0_13] : memref<1x1x16x16xf32, #tpu.memory_space<vmem>>, vector<1x1x16x15xf32>
    %8 = vector.shape_cast %7 : vector<1x1x16x15xf32> to vector<16x15xf32>
    %9 = arith.subf %6, %8 : vector<16x15xf32>
    %c0_14 = arith.constant 0 : index
    %c0_15 = arith.constant 0 : index
    %c1_16 = arith.constant 1 : index
    %c0_17 = arith.constant 0 : index
    %10 = vector.load %arg2[%c0_14, %c0_15, %c1_16, %c0_17] : memref<1x1x16x16xf32, #tpu.memory_space<vmem>>, vector<1x1x15x16xf32>
    %11 = vector.shape_cast %10 : vector<1x1x15x16xf32> to vector<15x16xf32>
    %c0_18 = arith.constant 0 : index
    %c0_19 = arith.constant 0 : index
    %c0_20 = arith.constant 0 : index
    %c0_21 = arith.constant 0 : index
    %12 = vector.load %arg2[%c0_18, %c0_19, %c0_20, %c0_21] : memref<1x1x16x16xf32, #tpu.memory_space<vmem>>, vector<1x1x15x16xf32>
    %13 = vector.shape_cast %12 : vector<1x1x15x16xf32> to vector<15x16xf32>
    %14 = arith.subf %11, %13 : vector<15x16xf32>
    %c0_22 = arith.constant 0 : index
    %c0_23 = arith.constant 0 : index
    %c1_24 = arith.constant 1 : index
    %c0_25 = arith.constant 0 : index
    %15 = vector.load %arg3[%c0_22, %c0_23, %c1_24, %c0_25] : memref<1x1x16x16xf32, #tpu.memory_space<vmem>>, vector<1x1x15x16xf32>
    %16 = vector.shape_cast %15 : vector<1x1x15x16xf32> to vector<15x16xf32>
    %c0_26 = arith.constant 0 : index
    %c0_27 = arith.constant 0 : index
    %c0_28 = arith.constant 0 : index
    %c0_29 = arith.constant 0 : index
    %17 = vector.load %arg3[%c0_26, %c0_27, %c0_28, %c0_29] : memref<1x1x16x16xf32, #tpu.memory_space<vmem>>, vector<1x1x15x16xf32>
    %18 = vector.shape_cast %17 : vector<1x1x15x16xf32> to vector<15x16xf32>
    %19 = arith.subf %16, %18 : vector<15x16xf32>
    %20 = arith.subf %4, %9 : vector<16x15xf32>
    %21 = math.absf %20 : vector<16x15xf32>
    %22 = vector.shape_cast %21 : vector<16x15xf32> to vector<1x16x15xf32>
    %cst = arith.constant dense<0.000000e+00> : vector<1xf32>
    %23 = vector.multi_reduction <add>, %22, %cst [1, 2] : vector<1x16x15xf32> to vector<1xf32>
    %24 = vector.shape_cast %23 : vector<1xf32> to vector<1x1x1xf32>
    %25 = vector.extract %24[0, 0, 0] : f32 from vector<1x1x1xf32>
    %cst_30 = arith.constant 1.73611115E-4 : f32
    %26 = arith.mulf %cst_30, %25 : f32
    %cst_31 = arith.constant 0.000000e+00 : f32
    %27 = arith.addf %cst_31, %26 : f32
    %28 = arith.subf %14, %19 : vector<15x16xf32>
    %29 = math.absf %28 : vector<15x16xf32>
    %30 = vector.shape_cast %29 : vector<15x16xf32> to vector<1x15x16xf32>
    %cst_32 = arith.constant dense<0.000000e+00> : vector<1xf32>
    %31 = vector.multi_reduction <add>, %30, %cst_32 [1, 2] : vector<1x15x16xf32> to vector<1xf32>
    %32 = vector.shape_cast %31 : vector<1xf32> to vector<1x1x1xf32>
    %33 = vector.extract %32[0, 0, 0] : f32 from vector<1x1x1xf32>
    %cst_33 = arith.constant 1.73611115E-4 : f32
    %34 = arith.mulf %cst_33, %33 : f32
    %35 = arith.addf %27, %34 : f32
    %c0_34 = arith.constant 0 : index
    %c0_35 = arith.constant 0 : index
    %c0_36 = arith.constant 0 : index
    %c1_37 = arith.constant 1 : index
    %36 = vector.load %arg4[%c0_34, %c0_35, %c0_36, %c1_37] : memref<1x1x8x8xf32, #tpu.memory_space<vmem>>, vector<1x1x8x7xf32>
    %37 = vector.shape_cast %36 : vector<1x1x8x7xf32> to vector<8x7xf32>
    %c0_38 = arith.constant 0 : index
    %c0_39 = arith.constant 0 : index
    %c0_40 = arith.constant 0 : index
    %c0_41 = arith.constant 0 : index
    %38 = vector.load %arg4[%c0_38, %c0_39, %c0_40, %c0_41] : memref<1x1x8x8xf32, #tpu.memory_space<vmem>>, vector<1x1x8x7xf32>
    %39 = vector.shape_cast %38 : vector<1x1x8x7xf32> to vector<8x7xf32>
    %40 = arith.subf %37, %39 : vector<8x7xf32>
    %c0_42 = arith.constant 0 : index
    %c0_43 = arith.constant 0 : index
    %c0_44 = arith.constant 0 : index
    %c1_45 = arith.constant 1 : index
    %41 = vector.load %arg5[%c0_42, %c0_43, %c0_44, %c1_45] : memref<1x1x8x8xf32, #tpu.memory_space<vmem>>, vector<1x1x8x7xf32>
    %42 = vector.shape_cast %41 : vector<1x1x8x7xf32> to vector<8x7xf32>
    %c0_46 = arith.constant 0 : index
    %c0_47 = arith.constant 0 : index
    %c0_48 = arith.constant 0 : index
    %c0_49 = arith.constant 0 : index
    %43 = vector.load %arg5[%c0_46, %c0_47, %c0_48, %c0_49] : memref<1x1x8x8xf32, #tpu.memory_space<vmem>>, vector<1x1x8x7xf32>
    %44 = vector.shape_cast %43 : vector<1x1x8x7xf32> to vector<8x7xf32>
    %45 = arith.subf %42, %44 : vector<8x7xf32>
    %c0_50 = arith.constant 0 : index
    %c0_51 = arith.constant 0 : index
    %c1_52 = arith.constant 1 : index
    %c0_53 = arith.constant 0 : index
    %46 = vector.load %arg4[%c0_50, %c0_51, %c1_52, %c0_53] : memref<1x1x8x8xf32, #tpu.memory_space<vmem>>, vector<1x1x7x8xf32>
    %47 = vector.shape_cast %46 : vector<1x1x7x8xf32> to vector<7x8xf32>
    %c0_54 = arith.constant 0 : index
    %c0_55 = arith.constant 0 : index
    %c0_56 = arith.constant 0 : index
    %c0_57 = arith.constant 0 : index
    %48 = vector.load %arg4[%c0_54, %c0_55, %c0_56, %c0_57] : memref<1x1x8x8xf32, #tpu.memory_space<vmem>>, vector<1x1x7x8xf32>
    %49 = vector.shape_cast %48 : vector<1x1x7x8xf32> to vector<7x8xf32>
    %50 = arith.subf %47, %49 : vector<7x8xf32>
    %c0_58 = arith.constant 0 : index
    %c0_59 = arith.constant 0 : index
    %c1_60 = arith.constant 1 : index
    %c0_61 = arith.constant 0 : index
    %51 = vector.load %arg5[%c0_58, %c0_59, %c1_60, %c0_61] : memref<1x1x8x8xf32, #tpu.memory_space<vmem>>, vector<1x1x7x8xf32>
    %52 = vector.shape_cast %51 : vector<1x1x7x8xf32> to vector<7x8xf32>
    %c0_62 = arith.constant 0 : index
    %c0_63 = arith.constant 0 : index
    %c0_64 = arith.constant 0 : index
    %c0_65 = arith.constant 0 : index
    %53 = vector.load %arg5[%c0_62, %c0_63, %c0_64, %c0_65] : memref<1x1x8x8xf32, #tpu.memory_space<vmem>>, vector<1x1x7x8xf32>
    %54 = vector.shape_cast %53 : vector<1x1x7x8xf32> to vector<7x8xf32>
    %55 = arith.subf %52, %54 : vector<7x8xf32>
    %56 = arith.subf %40, %45 : vector<8x7xf32>
    %57 = math.absf %56 : vector<8x7xf32>
    %58 = vector.shape_cast %57 : vector<8x7xf32> to vector<1x8x7xf32>
    %cst_66 = arith.constant dense<0.000000e+00> : vector<1xf32>
    %59 = vector.multi_reduction <add>, %58, %cst_66 [1, 2] : vector<1x8x7xf32> to vector<1xf32>
    %60 = vector.shape_cast %59 : vector<1xf32> to vector<1x1x1xf32>
    %61 = vector.extract %60[0, 0, 0] : f32 from vector<1x1x1xf32>
    %cst_67 = arith.constant 3.72023816E-4 : f32
    %62 = arith.mulf %cst_67, %61 : f32
    %63 = arith.addf %35, %62 : f32
    %64 = arith.subf %50, %55 : vector<7x8xf32>
    %65 = math.absf %64 : vector<7x8xf32>
    %66 = vector.shape_cast %65 : vector<7x8xf32> to vector<1x7x8xf32>
    %cst_68 = arith.constant dense<0.000000e+00> : vector<1xf32>
    %67 = vector.multi_reduction <add>, %66, %cst_68 [1, 2] : vector<1x7x8xf32> to vector<1xf32>
    %68 = vector.shape_cast %67 : vector<1xf32> to vector<1x1x1xf32>
    %69 = vector.extract %68[0, 0, 0] : f32 from vector<1x1x1xf32>
    %cst_69 = arith.constant 3.72023816E-4 : f32
    %70 = arith.mulf %cst_69, %69 : f32
    %71 = arith.addf %63, %70 : f32
    %c0_70 = arith.constant 0 : index
    %c0_71 = arith.constant 0 : index
    %c0_72 = arith.constant 0 : index
    %c1_73 = arith.constant 1 : index
    %72 = vector.load %arg6[%c0_70, %c0_71, %c0_72, %c1_73] : memref<1x1x4x4xf32, #tpu.memory_space<vmem>>, vector<1x1x4x3xf32>
    %73 = vector.shape_cast %72 : vector<1x1x4x3xf32> to vector<4x3xf32>
    %c0_74 = arith.constant 0 : index
    %c0_75 = arith.constant 0 : index
    %c0_76 = arith.constant 0 : index
    %c0_77 = arith.constant 0 : index
    %74 = vector.load %arg6[%c0_74, %c0_75, %c0_76, %c0_77] : memref<1x1x4x4xf32, #tpu.memory_space<vmem>>, vector<1x1x4x3xf32>
    %75 = vector.shape_cast %74 : vector<1x1x4x3xf32> to vector<4x3xf32>
    %76 = arith.subf %73, %75 : vector<4x3xf32>
    %c0_78 = arith.constant 0 : index
    %c0_79 = arith.constant 0 : index
    %c0_80 = arith.constant 0 : index
    %c1_81 = arith.constant 1 : index
    %77 = vector.load %arg7[%c0_78, %c0_79, %c0_80, %c1_81] : memref<1x1x4x4xf32, #tpu.memory_space<vmem>>, vector<1x1x4x3xf32>
    %78 = vector.shape_cast %77 : vector<1x1x4x3xf32> to vector<4x3xf32>
    %c0_82 = arith.constant 0 : index
    %c0_83 = arith.constant 0 : index
    %c0_84 = arith.constant 0 : index
    %c0_85 = arith.constant 0 : index
    %79 = vector.load %arg7[%c0_82, %c0_83, %c0_84, %c0_85] : memref<1x1x4x4xf32, #tpu.memory_space<vmem>>, vector<1x1x4x3xf32>
    %80 = vector.shape_cast %79 : vector<1x1x4x3xf32> to vector<4x3xf32>
    %81 = arith.subf %78, %80 : vector<4x3xf32>
    %c0_86 = arith.constant 0 : index
    %c0_87 = arith.constant 0 : index
    %c1_88 = arith.constant 1 : index
    %c0_89 = arith.constant 0 : index
    %82 = vector.load %arg6[%c0_86, %c0_87, %c1_88, %c0_89] : memref<1x1x4x4xf32, #tpu.memory_space<vmem>>, vector<1x1x3x4xf32>
    %83 = vector.shape_cast %82 : vector<1x1x3x4xf32> to vector<3x4xf32>
    %c0_90 = arith.constant 0 : index
    %c0_91 = arith.constant 0 : index
    %c0_92 = arith.constant 0 : index
    %c0_93 = arith.constant 0 : index
    %84 = vector.load %arg6[%c0_90, %c0_91, %c0_92, %c0_93] : memref<1x1x4x4xf32, #tpu.memory_space<vmem>>, vector<1x1x3x4xf32>
    %85 = vector.shape_cast %84 : vector<1x1x3x4xf32> to vector<3x4xf32>
    %86 = arith.subf %83, %85 : vector<3x4xf32>
    %c0_94 = arith.constant 0 : index
    %c0_95 = arith.constant 0 : index
    %c1_96 = arith.constant 1 : index
    %c0_97 = arith.constant 0 : index
    %87 = vector.load %arg7[%c0_94, %c0_95, %c1_96, %c0_97] : memref<1x1x4x4xf32, #tpu.memory_space<vmem>>, vector<1x1x3x4xf32>
    %88 = vector.shape_cast %87 : vector<1x1x3x4xf32> to vector<3x4xf32>
    %c0_98 = arith.constant 0 : index
    %c0_99 = arith.constant 0 : index
    %c0_100 = arith.constant 0 : index
    %c0_101 = arith.constant 0 : index
    %89 = vector.load %arg7[%c0_98, %c0_99, %c0_100, %c0_101] : memref<1x1x4x4xf32, #tpu.memory_space<vmem>>, vector<1x1x3x4xf32>
    %90 = vector.shape_cast %89 : vector<1x1x3x4xf32> to vector<3x4xf32>
    %91 = arith.subf %88, %90 : vector<3x4xf32>
    %92 = arith.subf %76, %81 : vector<4x3xf32>
    %93 = math.absf %92 : vector<4x3xf32>
    %94 = vector.shape_cast %93 : vector<4x3xf32> to vector<1x4x3xf32>
    %cst_102 = arith.constant dense<0.000000e+00> : vector<1xf32>
    %95 = vector.multi_reduction <add>, %94, %cst_102 [1, 2] : vector<1x4x3xf32> to vector<1xf32>
    %96 = vector.shape_cast %95 : vector<1xf32> to vector<1x1x1xf32>
    %97 = vector.extract %96[0, 0, 0] : f32 from vector<1x1x1xf32>
    %cst_103 = arith.constant 8.68055562E-4 : f32
    %98 = arith.mulf %cst_103, %97 : f32
    %99 = arith.addf %71, %98 : f32
    %100 = arith.subf %86, %91 : vector<3x4xf32>
    %101 = math.absf %100 : vector<3x4xf32>
    %102 = vector.shape_cast %101 : vector<3x4xf32> to vector<1x3x4xf32>
    %cst_104 = arith.constant dense<0.000000e+00> : vector<1xf32>
    %103 = vector.multi_reduction <add>, %102, %cst_104 [1, 2] : vector<1x3x4xf32> to vector<1xf32>
    %104 = vector.shape_cast %103 : vector<1xf32> to vector<1x1x1xf32>
    %105 = vector.extract %104[0, 0, 0] : f32 from vector<1x1x1xf32>
    %cst_105 = arith.constant 8.68055562E-4 : f32
    %106 = arith.mulf %cst_105, %105 : f32
    %107 = arith.addf %99, %106 : f32
    %108 = vector.broadcast %107 : f32 to vector<1x1xf32>
    %c0_106 = arith.constant 0 : index
    %c0_107 = arith.constant 0 : index
    %c0_108 = arith.constant 0 : index
    %c0_109 = arith.constant 0 : index
    %109 = vector.load %arg8[%c0_106, %c0_107, %c0_108, %c0_109] : memref<1x1x1x1xf32, #tpu.memory_space<vmem>>, vector<1x1x1x1xf32>
    %110 = vector.shape_cast %109 : vector<1x1x1x1xf32> to vector<1x1xf32>
    %111 = vector.shape_cast %108 : vector<1x1xf32> to vector<1x1x1x1xf32>
    tpu.vector_store %arg8[%c0_106, %c0_107, %c0_108, %c0_109], %111 {strides = array<i32>} : memref<1x1x1x1xf32, #tpu.memory_space<vmem>>, vector<1x1x1x1xf32>,
    return
  }
  func.func @transform_0(%arg0: i32, %arg1: i32) -> (i32, i32, i32, i32) {
    %c0_i32 = arith.constant 0 : i32
    %c0_i32_0 = arith.constant 0 : i32
    %c0_i32_1 = arith.constant 0 : i32
    return %arg0, %arg1, %c0_i32, %c0_i32_0 : i32, i32, i32, i32
  }
  func.func @transform_1(%arg0: i32, %arg1: i32) -> (i32, i32, i32, i32) {
    %c0_i32 = arith.constant 0 : i32
    %c0_i32_0 = arith.constant 0 : i32
    %c0_i32_1 = arith.constant 0 : i32
    return %arg0, %arg1, %c0_i32, %c0_i32_0 : i32, i32, i32, i32
  }
  func.func @transform_2(%arg0: i32, %arg1: i32) -> (i32, i32, i32, i32) {
    %c0_i32 = arith.constant 0 : i32
    %c0_i32_0 = arith.constant 0 : i32
    %c0_i32_1 = arith.constant 0 : i32
    return %arg0, %arg1, %c0_i32, %c0_i32_0 : i32, i32, i32, i32
  }
  func.func @transform_3(%arg0: i32, %arg1: i32) -> (i32, i32, i32, i32) {
    %c0_i32 = arith.constant 0 : i32
    %c0_i32_0 = arith.constant 0 : i32
    %c0_i32_1 = arith.constant 0 : i32
    return %arg0, %arg1, %c0_i32, %c0_i32_0 : i32, i32, i32, i32
  }
  func.func @transform_4(%arg0: i32, %arg1: i32) -> (i32, i32, i32, i32) {
    %c0_i32 = arith.constant 0 : i32
    %c0_i32_0 = arith.constant 0 : i32
    %c0_i32_1 = arith.constant 0 : i32
    return %arg0, %arg1, %c0_i32, %c0_i32_0 : i32, i32, i32, i32
  }
  func.func @transform_5(%arg0: i32, %arg1: i32) -> (i32, i32, i32, i32) {
    %c0_i32 = arith.constant 0 : i32
    %c0_i32_0 = arith.constant 0 : i32
    %c0_i32_1 = arith.constant 0 : i32
    return %arg0, %arg1, %c0_i32, %c0_i32_0 : i32, i32, i32, i32
  }
  func.func @transform_6(%arg0: i32, %arg1: i32) -> (i32, i32, i32, i32) {
    %c0_i32 = arith.constant 0 : i32
    %c0_i32_0 = arith.constant 0 : i32
    %c0_i32_1 = arith.constant 0 : i32
    return %arg0, %arg1, %c0_i32, %c0_i32_0 : i32, i32, i32, i32
  }
}

</mosaic_0001>

<llo_original>
// kernel: tpu_custom_call.1
$region0: #{tpu_custom_call.1}
  #allocation0 [shape = 'u32[]', space=smem, size = 0x4, offset = 0x4, fixed_abs, tag = 'smem constant byte address 0x4 - core index']
  #allocation1 [shape = 'u32[144,128]{1,0:T(1,128)}', space=vmem, size = 0x12000, scoped, tag = 'internal scratch']
  %s0 = inlined_call_operand.hbm [shape: f32[2,4,16,16], index: 0, kind: input, shape index: {}]
  %s1 = inlined_call_operand.hbm [shape: f32[2,4,16,16], index: 1, kind: input, shape index: {}]
  %s2 = inlined_call_operand.hbm [shape: f32[2,4,8,8], index: 2, kind: input, shape index: {}]
  %s3 = inlined_call_operand.hbm [shape: f32[2,4,8,8], index: 3, kind: input, shape index: {}]
  %s4 = inlined_call_operand.hbm [shape: f32[2,4,4,4], index: 4, kind: input, shape index: {}]
  %s5 = inlined_call_operand.hbm [shape: f32[2,4,4,4], index: 5, kind: input, shape index: {}]
  %s6 = inlined_call_operand.vmem [shape: f32[2,4,1,1], index: 6, kind: output, shape index: {}]
  %s7 = sld [smem:[#allocation0]]
  $region81: #{tpu_custom_call.1} parent=0
    _
  %s9 = ssub.s32 1, %s7
  %s10 = scalar_select 0, %s9, %s7
  $region1: #{tpu_custom_call.1} parent=0
    #allocation2 [shape = 'u8[16384]{0}', space=vmem, size = 0x4000, scoped, tag = 'input window, operand 0']
    #allocation3 [shape = 's32[2]{0}', space=sflag, size = 0x8, scoped, tag = 'scoped memory for tpu_custom_call.1']
    #allocation4 [shape = 'u8[16384]{0}', space=vmem, size = 0x4000, scoped, tag = 'input window, operand 1']
    #allocation5 [shape = 's32[2]{0}', space=sflag, size = 0x8, scoped, tag = 'scoped memory for tpu_custom_call.1']
    #allocation6 [shape = 'u8[8192]{0}', space=vmem, size = 0x2000, scoped, tag = 'input window, operand 2']
    #allocation7 [shape = 'u8[8192]{0}', space=vmem, size = 0x2000, scoped, tag = 'input window, operand 3']
    #allocation8 [shape = 's32[2]{0}', space=sflag, size = 0x8, scoped, tag = 'scoped memory for tpu_custom_call.1']
    #allocation9 [shape = 'u8[4096]{0}', space=vmem, size = 0x1000, scoped, tag = 'input window, operand 4']
    #allocation10 [shape = 'u8[4096]{0}', space=vmem, size = 0x1000, scoped, tag = 'input window, operand 5']
    #allocation11 [shape = 's32[2]{0}', space=sflag, size = 0x8, scoped, tag = 'scoped memory for tpu_custom_call.1']
    %11 = vsyncpa [#allocation3], 0
    %s12 = scalar_lea.sflag [#allocation3], 1
    %13 = vsyncpa %s12, 0
    %14 = vsyncpa [#allocation5], 0
    %s15 = scalar_lea.sflag [#allocation5], 1
    %16 = vsyncpa %s15, 0
    %17 = vsyncpa [#allocation8], 0
    %s18 = scalar_lea.sflag [#allocation8], 1
    %19 = vsyncpa %s18, 0
    %20 = vsyncpa [#allocation11], 0
    %s21 = scalar_lea.sflag [#allocation11], 1
    %22 = vsyncpa %s21, 0
    loop: start=0, step=1, limit=10
    $region2: #{tpu_custom_call.1} parent=1 // loop_pre_header
      _
    $region3: #{tpu_custom_call.1} parent=1 // loop_header
      %s24 = sphi 0, %s28
      %p25 = scmp.ge.s32.totalorder %s24, 10
      %s31 = sphi 0, %s43
      %s32 = sphi 0, %s39
      %s33 = sphi 0, %s31
      %s34 = sphi 0, %s32
      %s35 = sphi 0, %s33
      %s36 = sphi 0, %s34
      %s48 = sphi 0, %s50
      %s51 = sphi 0, %s48
      %s52 = sphi 0, %s51
      %s68 = sphi 0, %s52
      %s76 = sphi 0, %s78
      %s79 = sphi 0, %s76
      %s80 = sphi 0, %s79
      %s96 = sphi 0, %s80
      %s104 = sphi 0, %s106
      %s107 = sphi 0, %s104
      %s108 = sphi 0, %s107
      %s124 = sphi 0, %s108
      %s132 = sphi 0, %s134
      %s135 = sphi 0, %s132
      %s136 = sphi 0, %s135
      %s152 = sphi 0, %s136
      %s160 = sphi 0, %s162
      %s163 = sphi 0, %s160
      %s164 = sphi 0, %s163
      %s180 = sphi 0, %s164
      %s188 = sphi 0, %s190
      %s191 = sphi 0, %s188
      %s192 = sphi 0, %s191
      %s208 = sphi 0, %s192
      %s216 = sphi 0, %s218
      %s219 = sphi 0, %s216
      %s220 = sphi 0, %s219
      %s236 = sphi 0, %s220
    $region4: #{tpu_custom_call.1} parent=1 // loop_header_branch
      %27 = sbr.rel (%p25) target = $region8
    $region5: #{tpu_custom_call.1} parent=1 // loop_body
      %s29 = ssub.s32 %s24, 1
      %s30 = ssub.s32 %s24, 2
      %s37 = sadd.s32 1, %s32
      %p38 = scmp.ge.s32.totalorder %s37, 4
      %s39 = scalar_select %p38, 0, %s37
      %s40 = sadd.s32 1, %s31
      %s41 = scalar_select %p38, %s40, %s31
      %p42 = scmp.ge.s32.totalorder %s41, 2
      %s43 = scalar_select %p42, 0, %s41
      %s44 = ssub.s32 %s31, %s43
      %s45 = ssub.s32 %s32, %s39
      %s46 = sor.u32 %s44, %s45
      %p47 = scmp.eq.s32.totalorder %s46, 0
      %s49 = sadd.s32 %s48, 1
      %s50 = scalar_select %p47, %s48, %s49
      %p53 = pneg %p47
      %p54 = scmp.eq.s32.totalorder %s24, 7
      %p55 = por %p53, %p54
      %p56 = scmp.ne.s32.totalorder %s48, %s51
      %p57 = scmp.eq.s32.totalorder %s24, 0
      %p58 = por %p56, %p57
      %p59 = scmp.ne.s32.totalorder %s48, %s51
      %p60 = scmp.eq.s32.totalorder %s29, 7
      %p61 = por %p59, %p60
      %p62 = scmp.ne.s32.totalorder %s51, %s52
      %p63 = scmp.eq.s32.totalorder %s29, 0
      %p64 = por %p62, %p63
      %p65 = scmp.ne.s32.totalorder %s51, %s52
      %p66 = scmp.eq.s32.totalorder %s30, 7
      %p67 = por %p65, %p66
      %p69 = scmp.ne.s32.totalorder %s52, %s68
      %p70 = scmp.eq.s32.totalorder %s30, 0
      %p71 = por %p69, %p70
      %s72 = ssub.s32 %s31, %s43
      %s73 = ssub.s32 %s32, %s39
      %s74 = sor.u32 %s72, %s73
      %p75 = scmp.eq.s32.totalorder %s74, 0
      %s77 = sadd.s32 %s76, 1
      %s78 = scalar_select %p75, %s76, %s77
      %p81 = pneg %p75
      %p82 = scmp.eq.s32.totalorder %s24, 7
      %p83 = por %p81, %p82
      %p84 = scmp.ne.s32.totalorder %s76, %s79
      %p85 = scmp.eq.s32.totalorder %s24, 0
      %p86 = por %p84, %p85
      %p87 = scmp.ne.s32.totalorder %s76, %s79
      %p88 = scmp.eq.s32.totalorder %s29, 7
      %p89 = por %p87, %p88
      %p90 = scmp.ne.s32.totalorder %s79, %s80
      %p91 = scmp.eq.s32.totalorder %s29, 0
      %p92 = por %p90, %p91
      %p93 = scmp.ne.s32.totalorder %s79, %s80
      %p94 = scmp.eq.s32.totalorder %s30, 7
      %p95 = por %p93, %p94
      %p97 = scmp.ne.s32.totalorder %s80, %s96
      %p98 = scmp.eq.s32.totalorder %s30, 0
      %p99 = por %p97, %p98
      %s100 = ssub.s32 %s31, %s43
      %s101 = ssub.s32 %s32, %s39
      %s102 = sor.u32 %s100, %s101
      %p103 = scmp.eq.s32.totalorder %s102, 0
      %s105 = sadd.s32 %s104, 1
      %s106 = scalar_select %p103, %s104, %s105
      %p109 = pneg %p103
      %p110 = scmp.eq.s32.totalorder %s24, 7
      %p111 = por %p109, %p110
      %p112 = scmp.ne.s32.totalorder %s104, %s107
      %p113 = scmp.eq.s32.totalorder %s24, 0
      %p114 = por %p112, %p113
      %p115 = scmp.ne.s32.totalorder %s104, %s107
      %p116 = scmp.eq.s32.totalorder %s29, 7
      %p117 = por %p115, %p116
      %p118 = scmp.ne.s32.totalorder %s107, %s108
      %p119 = scmp.eq.s32.totalorder %s29, 0
      %p120 = por %p118, %p119
      %p121 = scmp.ne.s32.totalorder %s107, %s108
      %p122 = scmp.eq.s32.totalorder %s30, 7
      %p123 = por %p121, %p122
      %p125 = scmp.ne.s32.totalorder %s108, %s124
      %p126 = scmp.eq.s32.totalorder %s30, 0
      %p127 = por %p125, %p126
      %s128 = ssub.s32 %s31, %s43
      %s129 = ssub.s32 %s32, %s39
      %s130 = sor.u32 %s128, %s129
      %p131 = scmp.eq.s32.totalorder %s130, 0
      %s133 = sadd.s32 %s132, 1
      %s134 = scalar_select %p131, %s132, %s133
      %p137 = pneg %p131
      %p138 = scmp.eq.s32.totalorder %s24, 7
      %p139 = por %p137, %p138
      %p140 = scmp.ne.s32.totalorder %s132, %s135
      %p141 = scmp.eq.s32.totalorder %s24, 0
      %p142 = por %p140, %p141
      %p143 = scmp.ne.s32.totalorder %s132, %s135
      %p144 = scmp.eq.s32.totalorder %s29, 7
      %p145 = por %p143, %p144
      %p146 = scmp.ne.s32.totalorder %s135, %s136
      %p147 = scmp.eq.s32.totalorder %s29, 0
      %p148 = por %p146, %p147
      %p149 = scmp.ne.s32.totalorder %s135, %s136
      %p150 = scmp.eq.s32.totalorder %s30, 7
      %p151 = por %p149, %p150
      %p153 = scmp.ne.s32.totalorder %s136, %s152
      %p154 = scmp.eq.s32.totalorder %s30, 0
      %p155 = por %p153, %p154
      %s156 = ssub.s32 %s31, %s43
      %s157 = ssub.s32 %s32, %s39
      %s158 = sor.u32 %s156, %s157
      %p159 = scmp.eq.s32.totalorder %s158, 0
      %s161 = sadd.s32 %s160, 1
      %s162 = scalar_select %p159, %s160, %s161
      %p165 = pneg %p159
      %p166 = scmp.eq.s32.totalorder %s24, 7
      %p167 = por %p165, %p166
      %p168 = scmp.ne.s32.totalorder %s160, %s163
      %p169 = scmp.eq.s32.totalorder %s24, 0
      %p170 = por %p168, %p169
      %p171 = scmp.ne.s32.totalorder %s160, %s163
      %p172 = scmp.eq.s32.totalorder %s29, 7
      %p173 = por %p171, %p172
      %p174 = scmp.ne.s32.totalorder %s163, %s164
      %p175 = scmp.eq.s32.totalorder %s29, 0
      %p176 = por %p174, %p175
      %p177 = scmp.ne.s32.totalorder %s163, %s164
      %p178 = scmp.eq.s32.totalorder %s30, 7
      %p179 = por %p177, %p178
      %p181 = scmp.ne.s32.totalorder %s164, %s180
      %p182 = scmp.eq.s32.totalorder %s30, 0
      %p183 = por %p181, %p182
      %s184 = ssub.s32 %s31, %s43
      %s185 = ssub.s32 %s32, %s39
      %s186 = sor.u32 %s184, %s185
      %p187 = scmp.eq.s32.totalorder %s186, 0
      %s189 = sadd.s32 %s188, 1
      %s190 = scalar_select %p187, %s188, %s189
      %p193 = pneg %p187
      %p194 = scmp.eq.s32.totalorder %s24, 7
      %p195 = por %p193, %p194
      %p196 = scmp.ne.s32.totalorder %s188, %s191
      %p197 = scmp.eq.s32.totalorder %s24, 0
      %p198 = por %p196, %p197
      %p199 = scmp.ne.s32.totalorder %s188, %s191
      %p200 = scmp.eq.s32.totalorder %s29, 7
      %p201 = por %p199, %p200
      %p202 = scmp.ne.s32.totalorder %s191, %s192
      %p203 = scmp.eq.s32.totalorder %s29, 0
      %p204 = por %p202, %p203
      %p205 = scmp.ne.s32.totalorder %s191, %s192
      %p206 = scmp.eq.s32.totalorder %s30, 7
      %p207 = por %p205, %p206
      %p209 = scmp.ne.s32.totalorder %s192, %s208
      %p210 = scmp.eq.s32.totalorder %s30, 0
      %p211 = por %p209, %p210
      %s212 = ssub.s32 %s31, %s43
      %s213 = ssub.s32 %s32, %s39
      %s214 = sor.u32 %s212, %s213
      %p215 = scmp.eq.s32.totalorder %s214, 0
      %s217 = sadd.s32 %s216, 1
      %s218 = scalar_select %p215, %s216, %s217
      %p221 = pneg %p215
      %p222 = scmp.eq.s32.totalorder %s24, 7
      %p223 = por %p221, %p222
      %p224 = scmp.ne.s32.totalorder %s216, %s219
      %p225 = scmp.eq.s32.totalorder %s24, 0
      %p226 = por %p224, %p225
      %p227 = scmp.ne.s32.totalorder %s216, %s219
      %p228 = scmp.eq.s32.totalorder %s29, 7
      %p229 = por %p227, %p228
      %p230 = scmp.ne.s32.totalorder %s219, %s220
      %p231 = scmp.eq.s32.totalorder %s29, 0
      %p232 = por %p230, %p231
      %p233 = scmp.ne.s32.totalorder %s219, %s220
      %p234 = scmp.eq.s32.totalorder %s30, 7
      %p235 = por %p233, %p234
      %p237 = scmp.ne.s32.totalorder %s220, %s236
      %p238 = scmp.eq.s32.totalorder %s30, 0
      %p239 = por %p237, %p238
      %p240 = scmp.le.s32.totalorder 1, %s24
      %p241 = scmp.lt.s32.totalorder %s24, 9
      %p242 = pnand %p240, %p241
      %p243 = pneg %p242
      // Predicated region
      $region9: #{tpu_custom_call.1} parent=5 // pred_check
        _
      $region10: #{tpu_custom_call.1} parent=5 // pred_check_branch
        %245 = sbr.rel (%p242) target = $region12
      $region11: #{tpu_custom_call.1} parent=5 // pred_region
        %s246 = ssub.s32 %s24, 1
      $region12: #{tpu_custom_call.1} parent=5 // pred_fallthru
        _
      %p247 = scmp.lt.s32.totalorder %s24, 8
      // Predicated region
      $region13: #{tpu_custom_call.1} parent=5 // pred_check
        %p248 = pneg %p247
      $region14: #{tpu_custom_call.1} parent=5 // pred_check_branch
        %250 = sbr.rel (%p248) target = $region16
      $region15: #{tpu_custom_call.1} parent=5 // pred_region
        // Predicated region
        $region17: #{tpu_custom_call.1} parent=15 // pred_check
          %p251 = pneg %p58
        $region18: #{tpu_custom_call.1} parent=15 // pred_check_branch
          %253 = sbr.rel (%p251) target = $region20
        $region19: #{tpu_custom_call.1} parent=15 // pred_region
          %s254 = sand.u32 %s48, 1
          %s255 = scalar_lea.sflag [#allocation3], %s254
          %s256 = sand.u32 %s48, 1
          %s257 = smul.addr %s256, 16
          %s258 = scalar_lea.vmem [#allocation2], %s257
          %s260 = ssub.s32 256, 256
          %261 = vsyncadd %s255, %s260
          %s262 = smul.addr %s32, 2
          %s263 = smul.addr %s31, 8
          %s264 = sadd.s32 %s262, %s263
          %s265 = smul.addr %s264, 128
          %s266 = scalar_lea.hbm %s0, %s265
          %s267 = sshll.u32 %s258, 4
          %s268 = int_to_ptr.vmem [resolvable:$true] %s267
          %273 = dma.hbm_to_vmem [thread:$0]  %s266, 256, %s268, %s255, 128, 128, 8
        $region20: #{tpu_custom_call.1} parent=15 // pred_fallthru
          _
        // Predicated region
        $region21: #{tpu_custom_call.1} parent=15 // pred_check
          %p274 = pneg %p86
        $region22: #{tpu_custom_call.1} parent=15 // pred_check_branch
          %276 = sbr.rel (%p274) target = $region24
        $region23: #{tpu_custom_call.1} parent=15 // pred_region
          %s277 = sand.u32 %s24, 1
          %s278 = scalar_lea.sflag [#allocation5], %s277
          %s279 = sand.u32 %s76, 1
          %s280 = smul.addr %s279, 16
          %s281 = scalar_lea.vmem [#allocation4], %s280
          %s283 = ssub.s32 256, 256
          %284 = vsyncadd %s278, %s283
          %s285 = smul.addr %s32, 2
          %s286 = smul.addr %s31, 8
          %s287 = sadd.s32 %s285, %s286
          %s288 = smul.addr %s287, 128
          %s289 = scalar_lea.hbm %s1, %s288
          %s290 = sshll.u32 %s281, 4
          %s291 = int_to_ptr.vmem [resolvable:$true] %s290
          %296 = dma.hbm_to_vmem [thread:$0]  %s289, 256, %s291, %s278, 128, 128, 8
        $region24: #{tpu_custom_call.1} parent=15 // pred_fallthru
          _
        // Predicated region
        $region25: #{tpu_custom_call.1} parent=15 // pred_check
          %p297 = pneg %p114
        $region26: #{tpu_custom_call.1} parent=15 // pred_check_branch
          %299 = sbr.rel (%p297) target = $region28
        $region27: #{tpu_custom_call.1} parent=15 // pred_region
          %s300 = sand.u32 %s24, 1
          %s301 = scalar_lea.sflag [#allocation5], %s300
          %s302 = sand.u32 %s104, 1
          %s303 = smul.addr %s302, 8
          %s304 = scalar_lea.vmem [#allocation6], %s303
          %s306 = ssub.s32 128, 128
          %307 = vsyncadd %s301, %s306
          %s308 = smul.addr %s31, 4
          %s309 = sadd.s32 %s32, %s308
          %s310 = smul.addr %s309, 128
          %s311 = scalar_lea.hbm %s2, %s310
          %s313 = sshll.u32 %s304, 4
          %s314 = int_to_ptr.vmem [resolvable:$true] %s313
          %316 = dma.hbm_to_vmem [thread:$0]  %s311, 128, %s314, %s301
        $region28: #{tpu_custom_call.1} parent=15 // pred_fallthru
          _
        // Predicated region
        $region29: #{tpu_custom_call.1} parent=15 // pred_check
          %p317 = pneg %p142
        $region30: #{tpu_custom_call.1} parent=15 // pred_check_branch
          %319 = sbr.rel (%p317) target = $region32
        $region31: #{tpu_custom_call.1} parent=15 // pred_region
          %s320 = sand.u32 %s24, 1
          %s321 = scalar_lea.sflag [#allocation8], %s320
          %s322 = sand.u32 %s132, 1
          %s323 = smul.addr %s322, 8
          %s324 = scalar_lea.vmem [#allocation7], %s323
          %s326 = ssub.s32 128, 128
          %327 = vsyncadd %s321, %s326
          %s328 = smul.addr %s31, 4
          %s329 = sadd.s32 %s32, %s328
          %s330 = smul.addr %s329, 128
          %s331 = scalar_lea.hbm %s3, %s330
          %s333 = sshll.u32 %s324, 4
          %s334 = int_to_ptr.vmem [resolvable:$true] %s333
          %336 = dma.hbm_to_vmem [thread:$0]  %s331, 128, %s334, %s321
        $region32: #{tpu_custom_call.1} parent=15 // pred_fallthru
          _
        // Predicated region
        $region33: #{tpu_custom_call.1} parent=15 // pred_check
          %p337 = pneg %p170
        $region34: #{tpu_custom_call.1} parent=15 // pred_check_branch
          %339 = sbr.rel (%p337) target = $region36
        $region35: #{tpu_custom_call.1} parent=15 // pred_region
          %s340 = sand.u32 %s24, 1
          %s341 = scalar_lea.sflag [#allocation8], %s340
          %s342 = sand.u32 %s160, 1
          %s343 = smul.addr %s342, 4
          %s344 = scalar_lea.vmem [#allocation9], %s343
          %s346 = ssub.s32 64, 64
          %347 = vsyncadd %s341, %s346
          %s348 = smul.addr %s31, 4
          %s349 = sadd.s32 %s32, %s348
          %s350 = smul.addr %s349, 64
          %s351 = scalar_lea.hbm %s4, %s350
          %s353 = sshll.u32 %s344, 4
          %s354 = int_to_ptr.vmem [resolvable:$true] %s353
          %356 = dma.hbm_to_vmem [thread:$0]  %s351, 64, %s354, %s341
        $region36: #{tpu_custom_call.1} parent=15 // pred_fallthru
          _
        // Predicated region
        $region37: #{tpu_custom_call.1} parent=15 // pred_check
          %p357 = pneg %p198
        $region38: #{tpu_custom_call.1} parent=15 // pred_check_branch
          %359 = sbr.rel (%p357) target = $region40
        $region39: #{tpu_custom_call.1} parent=15 // pred_region
          %s360 = sand.u32 %s188, 1
          %s361 = scalar_lea.sflag [#allocation11], %s360
          %s362 = sand.u32 %s188, 1
          %s363 = smul.addr %s362, 4
          %s364 = scalar_lea.vmem [#allocation10], %s363
          %s366 = ssub.s32 64, 64
          %367 = vsyncadd %s361, %s366
          %s368 = smul.addr %s31, 4
          %s369 = sadd.s32 %s32, %s368
          %s370 = smul.addr %s369, 64
          %s371 = scalar_lea.hbm %s5, %s370
          %s373 = sshll.u32 %s364, 4
          %s374 = int_to_ptr.vmem [resolvable:$true] %s373
          %376 = dma.hbm_to_vmem [thread:$0]  %s371, 64, %s374, %s361
        $region40: #{tpu_custom_call.1} parent=15 // pred_fallthru
          _
      $region16: #{tpu_custom_call.1} parent=5 // pred_fallthru
        _
      %p377 = scmp.le.s32.totalorder 1, %s24
      %p378 = scmp.lt.s32.totalorder %s24, 9
      %p379 = pnand %p377, %p378
      %p380 = pneg %p379
      // Predicated region
      $region41: #{tpu_custom_call.1} parent=5 // pred_check
        _
      $region42: #{tpu_custom_call.1} parent=5 // pred_check_branch
        %382 = sbr.rel (%p379) target = $region44
      $region43: #{tpu_custom_call.1} parent=5 // pred_region
        %s383 = ssub.s32 %s24, 1
        %s384 = sand.u32 %s51, 1
        %s385 = scalar_lea.sflag [#allocation3], %s384
        %s386 = sand.u32 %s51, 1
        %s387 = smul.addr %s386, 16
        %s388 = scalar_lea.vmem [#allocation2], %s387
        // Predicated region
        $region45: #{tpu_custom_call.1} parent=43 // pred_check
          %p389 = pneg %p64
        $region46: #{tpu_custom_call.1} parent=43 // pred_check_branch
          %391 = sbr.rel (%p389) target = $region48
        $region47: #{tpu_custom_call.1} parent=43 // pred_region
          %392 = dma.done %s385, 256
        $region48: #{tpu_custom_call.1} parent=43 // pred_fallthru
          _
        %s393 = sand.u32 %s29, 1
        %s394 = scalar_lea.sflag [#allocation5], %s393
        %s395 = sand.u32 %s79, 1
        %s396 = smul.addr %s395, 16
        %s397 = scalar_lea.vmem [#allocation4], %s396
        // Predicated region
        $region49: #{tpu_custom_call.1} parent=43 // pred_check
          %p398 = pneg %p92
        $region50: #{tpu_custom_call.1} parent=43 // pred_check_branch
          %400 = sbr.rel (%p398) target = $region52
        $region51: #{tpu_custom_call.1} parent=43 // pred_region
          %401 = dma.done %s394, 256
        $region52: #{tpu_custom_call.1} parent=43 // pred_fallthru
          _
        %s402 = sand.u32 %s29, 1
        %s403 = scalar_lea.sflag [#allocation5], %s402
        %s404 = sand.u32 %s107, 1
        %s405 = smul.addr %s404, 8
        %s406 = scalar_lea.vmem [#allocation6], %s405
        // Predicated region
        $region53: #{tpu_custom_call.1} parent=43 // pred_check
          %p407 = pneg %p120
        $region54: #{tpu_custom_call.1} parent=43 // pred_check_branch
          %409 = sbr.rel (%p407) target = $region56
        $region55: #{tpu_custom_call.1} parent=43 // pred_region
          %410 = dma.done %s403, 128
        $region56: #{tpu_custom_call.1} parent=43 // pred_fallthru
          _
        %s411 = sand.u32 %s29, 1
        %s412 = scalar_lea.sflag [#allocation8], %s411
        %s413 = sand.u32 %s135, 1
        %s414 = smul.addr %s413, 8
        %s415 = scalar_lea.vmem [#allocation7], %s414
        // Predicated region
        $region57: #{tpu_custom_call.1} parent=43 // pred_check
          %p416 = pneg %p148
        $region58: #{tpu_custom_call.1} parent=43 // pred_check_branch
          %418 = sbr.rel (%p416) target = $region60
        $region59: #{tpu_custom_call.1} parent=43 // pred_region
          %419 = dma.done %s412, 128
        $region60: #{tpu_custom_call.1} parent=43 // pred_fallthru
          _
        %s420 = sand.u32 %s29, 1
        %s421 = scalar_lea.sflag [#allocation8], %s420
        %s422 = sand.u32 %s163, 1
        %s423 = smul.addr %s422, 4
        %s424 = scalar_lea.vmem [#allocation9], %s423
        // Predicated region
        $region61: #{tpu_custom_call.1} parent=43 // pred_check
          %p425 = pneg %p176
        $region62: #{tpu_custom_call.1} parent=43 // pred_check_branch
          %427 = sbr.rel (%p425) target = $region64
        $region63: #{tpu_custom_call.1} parent=43 // pred_region
          %428 = dma.done %s421, 64
        $region64: #{tpu_custom_call.1} parent=43 // pred_fallthru
          _
        %s429 = sand.u32 %s191, 1
        %s430 = scalar_lea.sflag [#allocation11], %s429
        %s431 = sand.u32 %s191, 1
        %s432 = smul.addr %s431, 4
        %s433 = scalar_lea.vmem [#allocation10], %s432
        // Predicated region
        $region65: #{tpu_custom_call.1} parent=43 // pred_check
          %p434 = pneg %p204
        $region66: #{tpu_custom_call.1} parent=43 // pred_check_branch
          %436 = sbr.rel (%p434) target = $region68
        $region67: #{tpu_custom_call.1} parent=43 // pred_region
          %437 = dma.done %s430, 64
        $region68: #{tpu_custom_call.1} parent=43 // pred_fallthru
          _
        %s438 = sand.u32 %s51, 1
        %s439 = scalar_lea.sflag [#allocation3], %s438
        %s440 = sand.u32 %s51, 1
        %s441 = smul.addr %s440, 16
        %s442 = scalar_lea.vmem [#allocation2], %s441
        %p443 = pneg %p64
        %p444 = pneg %p61
        %s445 = sand.u32 %s29, 1
        %s446 = scalar_lea.sflag [#allocation5], %s445
        %s447 = sand.u32 %s79, 1
        %s448 = smul.addr %s447, 16
        %s449 = scalar_lea.vmem [#allocation4], %s448
        %p450 = pneg %p92
        %p451 = pneg %p89
        %s452 = sand.u32 %s29, 1
        %s453 = scalar_lea.sflag [#allocation5], %s452
        %s454 = sand.u32 %s107, 1
        %s455 = smul.addr %s454, 8
        %s456 = scalar_lea.vmem [#allocation6], %s455
        %p457 = pneg %p120
        %p458 = pneg %p117
        %s459 = sand.u32 %s29, 1
        %s460 = scalar_lea.sflag [#allocation8], %s459
        %s461 = sand.u32 %s135, 1
        %s462 = smul.addr %s461, 8
        %s463 = scalar_lea.vmem [#allocation7], %s462
        %p464 = pneg %p148
        %p465 = pneg %p145
        %s466 = sand.u32 %s29, 1
        %s467 = scalar_lea.sflag [#allocation8], %s466
        %s468 = sand.u32 %s163, 1
        %s469 = smul.addr %s468, 4
        %s470 = scalar_lea.vmem [#allocation9], %s469
        %p471 = pneg %p176
        %p472 = pneg %p173
        %s473 = sand.u32 %s191, 1
        %s474 = scalar_lea.sflag [#allocation11], %s473
        %s475 = sand.u32 %s191, 1
        %s476 = smul.addr %s475, 4
        %s477 = scalar_lea.vmem [#allocation10], %s476
        %p478 = pneg %p204
        %p479 = pneg %p201
        %p480 = pneg %p232
        %p481 = pneg %p229
        %p482 = scmp.lt.s32.totalorder %s33, 1
        %s483 = scalar_select %p482, %s33, 1
        %p484 = scmp.lt.s32.totalorder %s34, 3
        %s485 = scalar_select %p484, %s34, 3
        %s486 = smul.addr %s483, 4
        %s487 = sadd.s32 %s485, %s486
        %s488 = scalar_lea.vmem %s6, %s487
        %p489 = scmp.lt.s32.totalorder %s33, 1
        %s490 = scalar_select %p489, %s33, 1
        %p491 = scmp.lt.s32.totalorder %s34, 3
        %s492 = scalar_select %p491, %s34, 3
        %s493 = smul.addr %s490, 4
        %s494 = sadd.s32 %s492, %s493
        %s495 = scalar_lea.vmem %s6, %s494
        %v496 = vld [vmem:[%s388] sm:$0xff]
        %v497 = vld [vmem:[%s388 + $0x8] sm:$0xff]
        %500 = vrot.lane.b32.xlu0 %v496, 1
        %v501 = vpop.permute.xlu0 %500
        %502 = vrot.lane.b32.xlu0 %v497, 1
        %v503 = vpop.permute.xlu0 %502
        %v506 = vsub.f32 %v496, %v501
        %v507 = vsub.f32 %v497, %v503
        %v508 = vld [vmem:[%s397] sm:$0xff]
        %v509 = vld [vmem:[%s397 + $0x8] sm:$0xff]
        %512 = vrot.lane.b32.xlu0 %v508, 1
        %v513 = vpop.permute.xlu0 %512
        %514 = vrot.lane.b32.xlu0 %v509, 1
        %v515 = vpop.permute.xlu0 %514
        %v518 = vsub.f32 %v508, %v513
        %v519 = vsub.f32 %v509, %v515
        %v520 = vld [vmem:[%s388 + $0x1] sm:$0xff]
        %v521 = vld [vmem:[%s388 + $0x9] sm:$0x7f]
        %v522 = vld [vmem:[%s388 + $0x8] sm:$0x7f]
        %v523 = vsub.f32 %v520, %v496
        %v524 = vsub.f32 %v521, %v522
        %v525 = vld [vmem:[%s397 + $0x1] sm:$0xff]
        %v526 = vld [vmem:[%s397 + $0x9] sm:$0x7f]
        %v527 = vld [vmem:[%s397 + $0x8] sm:$0x7f]
        %v528 = vsub.f32 %v525, %v508
        %v529 = vsub.f32 %v526, %v527
        %v530 = vsub.f32 %v506, %v518
        %v531 = vsub.f32 %v507, %v519
        %v532 = vand.u32 2147483647, %v530
        %v533 = vand.u32 2147483647, %v531
        %536 = vrot.lane.b32.xlu0 %v532, 127
        %v537 = vpop.permute.xlu0 %536
        %538 = vrot.lane.b32.xlu0 %v533, 127
        %v539 = vpop.permute.xlu0 %538
        %vm542 = vcmask 121856
        %v543 = vsel %vm542, %v537, 0.0
        %v544 = vsel %vm542, %v539, 0.0
        %v545 = vadd.f32 %v543, %v544
        %546 = vadd.xlane.f32.xlu0 %v545
        %v547 = vpop.xlane.xlu0 %546
        %v548 = vrot.slane %v547, 4
        %v549 = vadd.f32 %v547, %v548
        %v550 = vrot.slane %v549, 2
        %v551 = vadd.f32 %v549, %v550
        %v552 = vrot.slane %v551, 1
        %v553 = vadd.f32 %v551, %v552
        %s554 = vtos %v553
        %s555 = smul.f32 %s554, 0.00017361112
        %s556 = sadd.f32 %s555, 0.0
        %v557 = vsub.f32 %v523, %v528
        %v558 = vsub.f32 %v524, %v529
        %v559 = vand.u32 2147483647, %v557
        %v560 = vand.u32 2147483647, %v558
        %vm561 = vcmask 130048
        %v562 = vsel %vm561, %v559, 0.0
        %vm563 = vcmask 129024
        %v564 = vsel %vm563, %v560, 0.0
        %v565 = vadd.f32 %v562, %v564
        %566 = vadd.xlane.f32.xlu0 %v565
        %v567 = vpop.xlane.xlu0 %566
        %v568 = vrot.slane %v567, 4
        %v569 = vadd.f32 %v567, %v568
        %v570 = vrot.slane %v569, 2
        %v571 = vadd.f32 %v569, %v570
        %v572 = vrot.slane %v571, 1
        %v573 = vadd.f32 %v571, %v572
        %s574 = vtos %v573
        %s575 = smul.f32 %s574, 0.00017361112
        %s576 = sadd.f32 %s556, %s575
        %v577 = vld [vmem:[%s406] sm:$0xff]
        %579 = vrot.lane.b32.xlu0 %v577, 1
        %v580 = vpop.permute.xlu0 %579
        %v582 = vsub.f32 %v577, %v580
        %v583 = vld [vmem:[%s415] sm:$0xff]
        %585 = vrot.lane.b32.xlu0 %v583, 1
        %v586 = vpop.permute.xlu0 %585
        %v588 = vsub.f32 %v583, %v586
        %v589 = vld [vmem:[%s406 + $0x1] sm:$0x7f]
        %v590 = vld [vmem:[%s406] sm:$0x7f]
        %v591 = vsub.f32 %v589, %v590
        %v592 = vld [vmem:[%s415 + $0x1] sm:$0x7f]
        %v593 = vld [vmem:[%s415] sm:$0x7f]
        %v594 = vsub.f32 %v592, %v593
        %v595 = vsub.f32 %v582, %v588
        %v596 = vand.u32 2147483647, %v595
        %598 = vrot.lane.b32.xlu0 %v596, 127
        %v599 = vpop.permute.xlu0 %598
        %vm601 = vcmask 56320
        %v602 = vsel %vm601, %v599, 0.0
        %603 = vadd.xlane.f32.xlu0 %v602
        %v604 = vpop.xlane.xlu0 %603
        %v605 = vrot.slane %v604, 4
        %v606 = vadd.f32 %v604, %v605
        %v607 = vrot.slane %v606, 2
        %v608 = vadd.f32 %v606, %v607
        %v609 = vrot.slane %v608, 1
        %v610 = vadd.f32 %v608, %v609
        %s611 = vtos %v610
        %s612 = smul.f32 %s611, 0.00037202382
        %s613 = sadd.f32 %s576, %s612
        %v614 = vsub.f32 %v591, %v594
        %v615 = vand.u32 2147483647, %v614
        %vm616 = vcmask 63488
        %v617 = vsel %vm616, %v615, 0.0
        %618 = vadd.xlane.f32.xlu0 %v617
        %v619 = vpop.xlane.xlu0 %618
        %v620 = vrot.slane %v619, 4
        %v621 = vadd.f32 %v619, %v620
        %v622 = vrot.slane %v621, 2
        %v623 = vadd.f32 %v621, %v622
        %v624 = vrot.slane %v623, 1
        %v625 = vadd.f32 %v623, %v624
        %s626 = vtos %v625
        %s627 = smul.f32 %s626, 0.00037202382
        %s628 = sadd.f32 %s613, %s627
        %v629 = vld [vmem:[%s424] sm:$0xf]
        %631 = vrot.lane.b32.xlu0 %v629, 1
        %v632 = vpop.permute.xlu0 %631
        %v634 = vsub.f32 %v629, %v632
        %v635 = vld [vmem:[%s433] sm:$0xf]
        %637 = vrot.lane.b32.xlu0 %v635, 1
        %v638 = vpop.permute.xlu0 %637
        %v640 = vsub.f32 %v635, %v638
        %v641 = vld [vmem:[%s424 + $0x1] sm:$0x7]
        %v642 = vld [vmem:[%s424] sm:$0x7]
        %v643 = vsub.f32 %v641, %v642
        %v644 = vld [vmem:[%s433 + $0x1] sm:$0x7]
        %v645 = vld [vmem:[%s433] sm:$0x7]
        %v646 = vsub.f32 %v644, %v645
        %v647 = vsub.f32 %v634, %v640
        %v648 = vand.u32 2147483647, %v647
        %650 = vrot.lane.b32.xlu0 %v648, 127
        %v651 = vpop.permute.xlu0 %650
        %vm653 = vcmask 19456
        %v654 = vsel %vm653, %v651, 0.0
        %655 = vadd.xlane.f32.xlu0 %v654
        %v656 = vpop.xlane.xlu0 %655
        %v657 = vrot.slane %v656, 4
        %v658 = vadd.f32 %v656, %v657
        %v659 = vrot.slane %v658, 2
        %v660 = vadd.f32 %v658, %v659
        %v661 = vrot.slane %v660, 1
        %v662 = vadd.f32 %v660, %v661
        %s663 = vtos %v662
        %s664 = smul.f32 %s663, 0.00086805556
        %s665 = sadd.f32 %s628, %s664
        %v666 = vsub.f32 %v643, %v646
        %v667 = vand.u32 2147483647, %v666
        %vm668 = vcmask 26624
        %v669 = vsel %vm668, %v667, 0.0
        %670 = vadd.xlane.f32.xlu0 %v669
        %v671 = vpop.xlane.xlu0 %670
        %v672 = vrot.slane %v671, 4
        %v673 = vadd.f32 %v671, %v672
        %v674 = vrot.slane %v673, 2
        %v675 = vadd.f32 %v673, %v674
        %v676 = vrot.slane %v675, 1
        %v677 = vadd.f32 %v675, %v676
        %s678 = vtos %v677
        %s679 = smul.f32 %s678, 0.00086805556
        %s680 = sadd.f32 %s665, %s679
        %v681 = vstv %s680
        %vm682 = vcmask 0
        %683 = vst.msk [vmem:[%s495] sm:$0x1] %vm682, %v681
        %p684 = scmp.lt.s32.totalorder %s33, 1
        %s685 = scalar_select %p684, %s33, 1
        %p686 = scmp.lt.s32.totalorder %s34, 3
        %s687 = scalar_select %p686, %s34, 3
        %s688 = smul.addr %s685, 4
        %s689 = sadd.s32 %s687, %s688
        %s690 = scalar_lea.vmem %s6, %s689
        // Predicated region
        $region69: #{tpu_custom_call.1} parent=43 // pred_check
          %p691 = pneg %p229
        $region70: #{tpu_custom_call.1} parent=43 // pred_check_branch
          %693 = sbr.rel (%p691) target = $region72
        $region71: #{tpu_custom_call.1} parent=43 // pred_region
          _
        $region72: #{tpu_custom_call.1} parent=43 // pred_fallthru
          _
      $region44: #{tpu_custom_call.1} parent=5 // pred_fallthru
        _
      %p694 = scmp.le.s32.totalorder 2, %s24
      // Predicated region
      $region73: #{tpu_custom_call.1} parent=5 // pred_check
        %p695 = pneg %p694
      $region74: #{tpu_custom_call.1} parent=5 // pred_check_branch
        %697 = sbr.rel (%p695) target = $region76
      $region75: #{tpu_custom_call.1} parent=5 // pred_region
        %s698 = ssub.s32 %s24, 2
        // Predicated region
        $region77: #{tpu_custom_call.1} parent=75 // pred_check
          %p699 = pneg %p235
        $region78: #{tpu_custom_call.1} parent=75 // pred_check_branch
          %701 = sbr.rel (%p699) target = $region80
        $region79: #{tpu_custom_call.1} parent=75 // pred_region
          %p702 = scmp.lt.s32.totalorder %s35, 1
          %s703 = scalar_select %p702, %s35, 1
          %p704 = scmp.lt.s32.totalorder %s36, 3
          %s705 = scalar_select %p704, %s36, 3
          %s706 = smul.addr %s703, 4
          %s707 = sadd.s32 %s705, %s706
          %s708 = scalar_lea.vmem %s6, %s707
        $region80: #{tpu_custom_call.1} parent=75 // pred_fallthru
          _
      $region76: #{tpu_custom_call.1} parent=5 // pred_fallthru
        _
    $region6: #{tpu_custom_call.1} parent=1 // loop_footer
      %s28 = sadd.s32 1, %s24
    $region7: #{tpu_custom_call.1} parent=1 // loop_footer_branch
      %23 = sbr.rel target = $region3
    $region8: #{tpu_custom_call.1} parent=1 // loop_exit
      _
    %709 = vsyncpa [#allocation3], 1
    %s710 = scalar_lea.sflag [#allocation3], 1
    %711 = vsyncpa %s710, 1
    %712 = vsyncpa [#allocation5], 1
    %s713 = scalar_lea.sflag [#allocation5], 1
    %714 = vsyncpa %s713, 1
    %715 = vsyncpa [#allocation8], 1
    %s716 = scalar_lea.sflag [#allocation8], 1
    %717 = vsyncpa %s716, 1
    %718 = vsyncpa [#allocation11], 1
    %s719 = scalar_lea.sflag [#allocation11], 1
    %720 = vsyncpa %s719, 1

</llo_original>
